<compile_context>
chip_gen: v5e
topology: v5e:2x2
jax: 0.10.0
libtpu: 0.0.40
codegen_flags: <defaults>
</compile_context>

<pallas_src>
import jax
import jax.numpy as jnp
from jax.experimental import pallas as pl
from jax.experimental.pallas import tpu as pltpu


MAX_BATCH_TILE = 16384               # lanes per grid step (~13 MiB live activations)
VMEM_LIMIT_BYTES = 32 * 1024 * 1024  # lift v5e's 16 MiB default; == v6e/v7x default


def mlp_kernel(x_ref, w1_ref, b1_ref, w2_ref, b2_ref, w3_ref, b3_ref, o_ref):
    """One batch tile: x_ref (2, TB) f32, o_ref (1, TB) f32 (batch in the lane axis)."""
    x0 = x_ref[0:1, :]                                   # (1, TB)
    x1 = x_ref[1:2, :]                                   # (1, TB)

    # fc1 (K=2): two broadcast FMAs on the VPU, f32 math (portable across v5e/v6e/v7x).
    h1 = w1_ref[:, 0:1] * x0 + w1_ref[:, 1:2] * x1 + b1_ref[...]   # (64, TB) f32
    h1 = jnp.maximum(h1, 0.0)                                      # ReLU

    # fc2: bf16 at the MXU boundary (w2 already bf16), f32 accumulation.
    h2 = jnp.dot(w2_ref[...], h1.astype(jnp.bfloat16),
                 preferred_element_type=jnp.float32) + b2_ref[...]  # (64, TB) f32
    h2 = jnp.maximum(h2, 0.0)                                      # ReLU

    # fc3: (1,64) @ (64,TB) on the (otherwise idle) MXU -> lane-dense (1, TB) row.
    out = jnp.dot(w3_ref[...], h2.astype(jnp.bfloat16),
                  preferred_element_type=jnp.float32) + b3_ref[0]
    o_ref[...] = out.astype(o_ref.dtype)


def _plan_batch(batch, max_tile=MAX_BATCH_TILE):
    """Return (tile, steps, padded_batch).

    tile   : multiple of 128 (lane-dense, unmasked vst), <= max_tile (VMEM budget)
    steps  : even and >= 2 (software pipelining + both v7x TensorCores get work)
    padded : tile * steps >= batch (wrapper zero-pads; extra rows are sliced off)
    """
    steps = max(2, -(-batch // max_tile))      # ceil-div
    if steps % 2:
        steps += 1
    tile = -(-batch // steps)                  # ceil-div
    tile = ((tile + 127) // 128) * 128         # round up to a full 128-lane vreg
    return tile, steps, tile * steps


def simple_net_forward(x, params, *, max_batch_tile=MAX_BATCH_TILE):
    """x: (B, 2) float32. Returns (B, 1) float32."""
    w1, b1, w2, b2, w3, b3 = params
    batch = x.shape[0]
    tile, steps, padded = _plan_batch(batch, max_batch_tile)

    if padded != batch:
        x = jnp.pad(x, ((0, padded - batch), (0, 0)))
    xt = x.T                                   # (2, padded): batch into the lane axis

    # MXU operands in bf16 (cast once, tiny arrays); VPU / bias math stays f32.
    w2b = w2.astype(jnp.bfloat16)
    w3b = w3.astype(jnp.bfloat16)

    rep = lambda i: (0, 0)                     # weights: single resident block

    flops = padded * (2 * 2 * 64 + 2 * 64 * 64 + 2 * 64 * 1)
    bytes_accessed = padded * 12 + (64 * 2 * 4 + 64 * 4 + 64 * 64 * 2
                                    + 64 * 4 + 64 * 2 + 4)

    out_t = pl.pallas_call(
        mlp_kernel,
        out_shape=jax.ShapeDtypeStruct((1, padded), jnp.float32),
        grid_spec=pltpu.PrefetchScalarGridSpec(
            num_scalar_prefetch=0,
            grid=(steps,),
            in_specs=[
                pl.BlockSpec((2, tile), lambda i: (0, i)),            # x^T, tiled over lanes
                pl.BlockSpec((64, 2), rep),                           # fc1.weight (out, in)
                pl.BlockSpec((64, 1), rep),                           # fc1.bias   (out, 1)
                pl.BlockSpec((64, 64), rep),                          # fc2.weight (bf16)
                pl.BlockSpec((64, 1), rep),                           # fc2.bias
                pl.BlockSpec((1, 64), rep),                           # fc3.weight (bf16)
                pl.BlockSpec(memory_space=pltpu.MemorySpace.SMEM),    # fc3.bias scalar
            ],
            out_specs=pl.BlockSpec((1, tile), lambda i: (0, i)),      # lane-dense output row
        ),
        compiler_params=pltpu.CompilerParams(
            dimension_semantics=("parallel",),
            vmem_limit_bytes=VMEM_LIMIT_BYTES,
            # Fuse the pad/transpose of x into the kernel's input DMA (avoid a second
            # HBM pass over the batch for what is otherwise a mem/overhead-bound op).
            allow_input_fusion=[True, False, False, False, False, False, False],
        ),
        cost_estimate=pl.CostEstimate(
            flops=flops, transcendentals=0, bytes_accessed=bytes_accessed),
    )(xt, w1, b1, w2b, b2, w3b, b3)

    return out_t[0, :batch].reshape(batch, 1)


def init_params(key):
    """Deterministic init matching nn.Linear shapes, stored in PyTorch's native
    (out_features, in_features) orientation; biases as (out, 1) columns."""
    k1, k2, k3, k4, k5, k6 = jax.random.split(key, 6)

    def uniform(k, shape, fan_in):
        bound = 1.0 / jnp.sqrt(fan_in)
        return jax.random.uniform(k, shape, jnp.float32, -bound, bound)

    w1 = uniform(k1, (64, 2), 2.0)     # fc1.weight
    b1 = uniform(k2, (64, 1), 2.0)     # fc1.bias
    w2 = uniform(k3, (64, 64), 64.0)   # fc2.weight
    b2 = uniform(k4, (64, 1), 64.0)    # fc2.bias
    w3 = uniform(k5, (1, 64), 64.0)    # fc3.weight
    b3 = uniform(k6, (1,), 64.0)       # fc3.bias (scalar, lives in SMEM)
    return (w1, b1, w2, b2, w3, b3)


def reference_forward(x, params):
    """Pure-JAX f32 reference with the same math as the PyTorch module."""
    w1, b1, w2, b2, w3, b3 = params
    h1 = jnp.maximum(x @ w1.T + b1[:, 0], 0.0)
    h2 = jnp.maximum(h1 @ w2.T + b2[:, 0], 0.0)
    return h2 @ w3.T + b3


if __name__ == "__main__":
    key = jax.random.PRNGKey(0)
    kx, kp = jax.random.split(key)
    params = init_params(kp)

    # Small but representative: two lane-dense 128-wide tiles -> even grid=(2,)
    # (exercises pipelining and the "parallel" dual-TensorCore path on v7x).
    B = 256
    x = jax.random.normal(kx, (B, 2), dtype=jnp.float32)
    out = jax.block_until_ready(simple_net_forward(x, params))
    ref = reference_forward(x, params)
    assert out.shape == (B, 1)
    # bf16 MXU operands (f32 accumulation) => relaxed tolerance vs the f32 reference.
    assert jnp.allclose(out, ref, atol=2e-2, rtol=2e-2), float(jnp.abs(out - ref).max())

    # Ragged batch: exercises the zero-pad path (B not a multiple of 128).
    B2 = 200
    x2 = jax.random.normal(jax.random.PRNGKey(1), (B2, 2), dtype=jnp.float32)
    out2 = jax.block_until_ready(simple_net_forward(x2, params))
    ref2 = reference_forward(x2, params)
    assert out2.shape == (B2, 1)
    assert jnp.allclose(out2, ref2, atol=2e-2, rtol=2e-2), float(jnp.abs(out2 - ref2).max())

    print("KERNEL_OK")
</pallas_src>

<mosaic_0001>
module attributes {stable_mosaic.version = 11 : i64} {
  func.func @mlp_kernel(%arg0: i32, %arg1: memref<2x128xf32, #tpu.memory_space<vmem>>, %arg2: memref<64x2xf32, #tpu.memory_space<vmem>>, %arg3: memref<64x1xf32, #tpu.memory_space<vmem>>, %arg4: memref<64x64xbf16, #tpu.memory_space<vmem>>, %arg5: memref<64x1xf32, #tpu.memory_space<vmem>>, %arg6: memref<1x64xbf16, #tpu.memory_space<vmem>>, %arg7: memref<1xf32, #tpu.memory_space<smem>>, %arg8: memref<1x128xf32, #tpu.memory_space<vmem>>) attributes {dimension_semantics = [#tpu.dimension_semantics<parallel>], iteration_bounds = array<i64: 2>, scalar_prefetch = 0 : i64, scratch_operands = 0 : i64, tpu.core_type = #tpu.core_type<tc>, window_params = [{transform_indices = @transform_0, window_bounds = array<i64: 2, 128>}, {pipeline_mode = #tpu.pipeline_mode<synchronous>, transform_indices = @transform_1, window_bounds = array<i64: 64, 2>}, {pipeline_mode = #tpu.pipeline_mode<synchronous>, transform_indices = @transform_2, window_bounds = array<i64: 64, 1>}, {pipeline_mode = #tpu.pipeline_mode<synchronous>, transform_indices = @transform_3, window_bounds = array<i64: 64, 64>}, {pipeline_mode = #tpu.pipeline_mode<synchronous>, transform_indices = @transform_4, window_bounds = array<i64: 64, 1>}, {pipeline_mode = #tpu.pipeline_mode<synchronous>, transform_indices = @transform_5, window_bounds = array<i64: 1, 64>}, {transform_indices = @transform_6, window_bounds = array<i64: 1>}, {transform_indices = @transform_7, window_bounds = array<i64: 1, 128>}]} {
    %c0 = arith.constant 0 : index
    %c0_0 = arith.constant 0 : index
    %0 = vector.load %arg1[%c0, %c0_0] : memref<2x128xf32, #tpu.memory_space<vmem>>, vector<1x128xf32>
    %c1 = arith.constant 1 : index
    %c0_1 = arith.constant 0 : index
    %1 = vector.load %arg1[%c1, %c0_1] : memref<2x128xf32, #tpu.memory_space<vmem>>, vector<1x128xf32>
    %c0_2 = arith.constant 0 : index
    %c0_3 = arith.constant 0 : index
    %2 = vector.load %arg2[%c0_2, %c0_3] : memref<64x2xf32, #tpu.memory_space<vmem>>, vector<64x1xf32>
    %3 = vector.broadcast %2 : vector<64x1xf32> to vector<64x128xf32>
    %4 = vector.broadcast %0 : vector<1x128xf32> to vector<64x128xf32>
    %5 = arith.mulf %3, %4 : vector<64x128xf32>
    %c0_4 = arith.constant 0 : index
    %c1_5 = arith.constant 1 : index
    %6 = vector.load %arg2[%c0_4, %c1_5] : memref<64x2xf32, #tpu.memory_space<vmem>>, vector<64x1xf32>
    %7 = vector.broadcast %6 : vector<64x1xf32> to vector<64x128xf32>
    %8 = vector.broadcast %1 : vector<1x128xf32> to vector<64x128xf32>
    %9 = arith.mulf %7, %8 : vector<64x128xf32>
    %10 = arith.addf %5, %9 : vector<64x128xf32>
    %c0_6 = arith.constant 0 : index
    %c0_7 = arith.constant 0 : index
    %11 = vector.load %arg3[%c0_6, %c0_7] : memref<64x1xf32, #tpu.memory_space<vmem>>, vector<64x1xf32>
    %12 = vector.broadcast %11 : vector<64x1xf32> to vector<64x128xf32>
    %13 = arith.addf %10, %12 : vector<64x128xf32>
    %cst = arith.constant 0.000000e+00 : f32
    %14 = vector.broadcast %cst : f32 to vector<64x128xf32>
    %15 = arith.maximumf %13, %14 : vector<64x128xf32>
    %c0_8 = arith.constant 0 : index
    %c0_9 = arith.constant 0 : index
    %16 = vector.load %arg4[%c0_8, %c0_9] : memref<64x64xbf16, #tpu.memory_space<vmem>>, vector<64x64xbf16>
    %17 = arith.truncf %15 : vector<64x128xf32> to vector<64x128xbf16>
    %cst_10 = arith.constant dense<0.000000e+00> : vector<64x128xf32>
    %18 = tpu.matmul %16, %17, %cst_10 {dimension_numbers = #tpu.dot_dimension_numbers<[1], [0], [0], [1], [0, 0, 1, 1], [], []>} : vector<64x64xbf16>, vector<64x128xbf16>, vector<64x128xf32> -> vector<64x128xf32>
    %c0_11 = arith.constant 0 : index
    %c0_12 = arith.constant 0 : index
    %19 = vector.load %arg5[%c0_11, %c0_12] : memref<64x1xf32, #tpu.memory_space<vmem>>, vector<64x1xf32>
    %20 = vector.broadcast %19 : vector<64x1xf32> to vector<64x128xf32>
    %21 = arith.addf %18, %20 : vector<64x128xf32>
    %cst_13 = arith.constant 0.000000e+00 : f32
    %22 = vector.broadcast %cst_13 : f32 to vector<64x128xf32>
    %23 = arith.maximumf %21, %22 : vector<64x128xf32>
    %c0_14 = arith.constant 0 : index
    %c0_15 = arith.constant 0 : index
    %24 = vector.load %arg6[%c0_14, %c0_15] : memref<1x64xbf16, #tpu.memory_space<vmem>>, vector<1x64xbf16>
    %25 = arith.truncf %23 : vector<64x128xf32> to vector<64x128xbf16>
    %cst_16 = arith.constant dense<0.000000e+00> : vector<1x128xf32>
    %26 = tpu.matmul %24, %25, %cst_16 {dimension_numbers = #tpu.dot_dimension_numbers<[1], [0], [0], [1], [0, 0, 1, 1], [], []>} : vector<1x64xbf16>, vector<64x128xbf16>, vector<1x128xf32> -> vector<1x128xf32>
    %c0_17 = arith.constant 0 : index
    %27 = memref.load %arg7[%c0_17] : memref<1xf32, #tpu.memory_space<smem>>
    %28 = vector.broadcast %27 : f32 to vector<1x128xf32>
    %29 = arith.addf %26, %28 : vector<1x128xf32>
    %c0_18 = arith.constant 0 : index
    %c0_19 = arith.constant 0 : index
    %30 = vector.load %arg8[%c0_18, %c0_19] : memref<1x128xf32, #tpu.memory_space<vmem>>, vector<1x128xf32>
    tpu.vector_store %arg8[%c0_18, %c0_19], %29 {strides = array<i32>} : memref<1x128xf32, #tpu.memory_space<vmem>>, vector<1x128xf32>,
    return
  }
  func.func @transform_0(%arg0: i32) -> (i32, i32) {
    %c0_i32 = arith.constant 0 : i32
    %c0_i32_0 = arith.constant 0 : i32
    return %c0_i32, %arg0 : i32, i32
  }
  func.func @transform_1(%arg0: i32) -> (i32, i32) {
    %c0_i32 = arith.constant 0 : i32
    %c0_i32_0 = arith.constant 0 : i32
    %c0_i32_1 = arith.constant 0 : i32
    return %c0_i32, %c0_i32_0 : i32, i32
  }
  func.func @transform_2(%arg0: i32) -> (i32, i32) {
    %c0_i32 = arith.constant 0 : i32
    %c0_i32_0 = arith.constant 0 : i32
    %c0_i32_1 = arith.constant 0 : i32
    return %c0_i32, %c0_i32_0 : i32, i32
  }
  func.func @transform_3(%arg0: i32) -> (i32, i32) {
    %c0_i32 = arith.constant 0 : i32
    %c0_i32_0 = arith.constant 0 : i32
    %c0_i32_1 = arith.constant 0 : i32
    return %c0_i32, %c0_i32_0 : i32, i32
  }
  func.func @transform_4(%arg0: i32) -> (i32, i32) {
    %c0_i32 = arith.constant 0 : i32
    %c0_i32_0 = arith.constant 0 : i32
    %c0_i32_1 = arith.constant 0 : i32
    return %c0_i32, %c0_i32_0 : i32, i32
  }
  func.func @transform_5(%arg0: i32) -> (i32, i32) {
    %c0_i32 = arith.constant 0 : i32
    %c0_i32_0 = arith.constant 0 : i32
    %c0_i32_1 = arith.constant 0 : i32
    return %c0_i32, %c0_i32_0 : i32, i32
  }
  func.func @transform_6(%arg0: i32) -> i32 {
    %c0_i32 = arith.constant 0 : i32
    %c0_i32_0 = arith.constant 0 : i32
    return %c0_i32 : i32
  }
  func.func @transform_7(%arg0: i32) -> (i32, i32) {
    %c0_i32 = arith.constant 0 : i32
    %c0_i32_0 = arith.constant 0 : i32
    return %c0_i32, %arg0 : i32, i32
  }
}

</mosaic_0001>

<llo_original>
// kernel: tpu_custom_call.1
$region0: #{tpu_custom_call.1}
  #allocation0 [shape = 'u32[]', space=smem, size = 0x4, offset = 0x4, fixed_abs, tag = 'smem constant byte address 0x4 - core index']
  #allocation1 [shape = 'u32[72,128]{1,0:T(1,128)}', space=vmem, size = 0x9000, scoped, tag = 'internal scratch']
  #allocation2 [shape = 'f32[1]{0:T(128)S(6)}', space=smem, size = 0x200, scoped, tag = 'scoped memory for tpu_custom_call.1']
  %s0 = inlined_call_operand.vmem [shape: f32[2,256], index: 0, kind: input, shape index: {}]
  %s1 = inlined_call_operand.vmem [shape: f32[64,2], index: 1, kind: input, shape index: {}]
  %s2 = inlined_call_operand.vmem [shape: f32[64,1], index: 2, kind: input, shape index: {}]
  %s3 = inlined_call_operand.vmem [shape: bf16[64,64], index: 3, kind: input, shape index: {}]
  %s4 = inlined_call_operand.vmem [shape: f32[64,1], index: 4, kind: input, shape index: {}]
  %s5 = inlined_call_operand.vmem [shape: bf16[1,64], index: 5, kind: input, shape index: {}]
  %s6 = inlined_call_operand.<no memory space> [shape: f32[1], index: 6, kind: input, shape index: {}]
  %s7 = inlined_call_operand.hbm [shape: f32[1,256], index: 7, kind: output, shape index: {}]
  %s8 = sld [smem:[#allocation0]]
  $region61: #{tpu_custom_call.1} parent=0
    _
  %s10 = ssub.s32 1, %s8
  %s11 = scalar_select 0, %s10, %s8
  %12 = sst [smem:[#allocation2]] %s6
  $region1: #{tpu_custom_call.1} parent=0
    #allocation3 [shape = 'u8[1024]{0}', space=vmem, size = 0x400, scoped, tag = 'output window, operand 0']
    #allocation4 [shape = 's32[2]{0}', space=sflag, size = 0x8, scoped, tag = 'scoped memory for tpu_custom_call.1']
    %13 = vsyncpa [#allocation4], 0
    %s14 = scalar_lea.sflag [#allocation4], 1
    %15 = vsyncpa %s14, 0
    loop: start=0, step=1, limit=4
    $region2: #{tpu_custom_call.1} parent=1 // loop_pre_header
      _
    $region3: #{tpu_custom_call.1} parent=1 // loop_header
      %s17 = sphi 0, %s21
      %p18 = scmp.ge.s32.totalorder %s17, 4
      %s27 = sphi 0, %s29
      %s30 = sphi 0, %s27
      %s31 = sphi 0, %s30
      %s47 = sphi 0, %s31
      %s51 = sphi 0, %s51
      %s53 = sphi 0, %s51
      %s54 = sphi 0, %s53
      %s68 = sphi 0, %s54
      %s72 = sphi 0, %s72
      %s74 = sphi 0, %s72
      %s75 = sphi 0, %s74
      %s89 = sphi 0, %s75
      %s93 = sphi 0, %s93
      %s95 = sphi 0, %s93
      %s96 = sphi 0, %s95
      %s110 = sphi 0, %s96
      %s114 = sphi 0, %s114
      %s116 = sphi 0, %s114
      %s117 = sphi 0, %s116
      %s131 = sphi 0, %s117
      %s135 = sphi 0, %s135
      %s137 = sphi 0, %s135
      %s138 = sphi 0, %s137
      %s152 = sphi 0, %s138
      %s156 = sphi 0, %s156
      %s158 = sphi 0, %s156
      %s159 = sphi 0, %s158
      %s173 = sphi 0, %s159
      %s179 = sphi 0, %s181
      %s182 = sphi 0, %s179
      %s183 = sphi 0, %s182
      %s199 = sphi 0, %s183
    $region4: #{tpu_custom_call.1} parent=1 // loop_header_branch
      %20 = sbr.rel (%p18) target = $region8
    $region5: #{tpu_custom_call.1} parent=1 // loop_body
      %s22 = ssub.s32 %s17, 1
      %s23 = ssub.s32 %s17, 2
      %s24 = sadd.s32 %s17, 1
      %s25 = ssub.s32 %s17, %s24
      %p26 = scmp.eq.s32.totalorder %s25, 0
      %s28 = sadd.s32 %s27, 1
      %s29 = scalar_select %p26, %s27, %s28
      %p32 = pneg %p26
      %p33 = scmp.eq.s32.totalorder %s17, 1
      %p34 = por %p32, %p33
      %p35 = scmp.ne.s32.totalorder %s27, %s30
      %p36 = scmp.eq.s32.totalorder %s17, 0
      %p37 = por %p35, %p36
      %p38 = scmp.ne.s32.totalorder %s27, %s30
      %p39 = scmp.eq.s32.totalorder %s22, 1
      %p40 = por %p38, %p39
      %p41 = scmp.ne.s32.totalorder %s30, %s31
      %p42 = scmp.eq.s32.totalorder %s22, 0
      %p43 = por %p41, %p42
      %p44 = scmp.ne.s32.totalorder %s30, %s31
      %p45 = scmp.eq.s32.totalorder %s23, 1
      %p46 = por %p44, %p45
      %p48 = scmp.ne.s32.totalorder %s31, %s47
      %p49 = scmp.eq.s32.totalorder %s23, 0
      %p50 = por %p48, %p49
      %s52 = sadd.s32 %s51, 1
      %p55 = scmp.eq.s32.totalorder %s17, 1
      %p56 = scmp.ne.s32.totalorder %s51, %s53
      %p57 = scmp.eq.s32.totalorder %s17, 0
      %p58 = por %p56, %p57
      %p59 = scmp.ne.s32.totalorder %s51, %s53
      %p60 = scmp.eq.s32.totalorder %s22, 1
      %p61 = por %p59, %p60
      %p62 = scmp.ne.s32.totalorder %s53, %s54
      %p63 = scmp.eq.s32.totalorder %s22, 0
      %p64 = por %p62, %p63
      %p65 = scmp.ne.s32.totalorder %s53, %s54
      %p66 = scmp.eq.s32.totalorder %s23, 1
      %p67 = por %p65, %p66
      %p69 = scmp.ne.s32.totalorder %s54, %s68
      %p70 = scmp.eq.s32.totalorder %s23, 0
      %p71 = por %p69, %p70
      %s73 = sadd.s32 %s72, 1
      %p76 = scmp.eq.s32.totalorder %s17, 1
      %p77 = scmp.ne.s32.totalorder %s72, %s74
      %p78 = scmp.eq.s32.totalorder %s17, 0
      %p79 = por %p77, %p78
      %p80 = scmp.ne.s32.totalorder %s72, %s74
      %p81 = scmp.eq.s32.totalorder %s22, 1
      %p82 = por %p80, %p81
      %p83 = scmp.ne.s32.totalorder %s74, %s75
      %p84 = scmp.eq.s32.totalorder %s22, 0
      %p85 = por %p83, %p84
      %p86 = scmp.ne.s32.totalorder %s74, %s75
      %p87 = scmp.eq.s32.totalorder %s23, 1
      %p88 = por %p86, %p87
      %p90 = scmp.ne.s32.totalorder %s75, %s89
      %p91 = scmp.eq.s32.totalorder %s23, 0
      %p92 = por %p90, %p91
      %s94 = sadd.s32 %s93, 1
      %p97 = scmp.eq.s32.totalorder %s17, 1
      %p98 = scmp.ne.s32.totalorder %s93, %s95
      %p99 = scmp.eq.s32.totalorder %s17, 0
      %p100 = por %p98, %p99
      %p101 = scmp.ne.s32.totalorder %s93, %s95
      %p102 = scmp.eq.s32.totalorder %s22, 1
      %p103 = por %p101, %p102
      %p104 = scmp.ne.s32.totalorder %s95, %s96
      %p105 = scmp.eq.s32.totalorder %s22, 0
      %p106 = por %p104, %p105
      %p107 = scmp.ne.s32.totalorder %s95, %s96
      %p108 = scmp.eq.s32.totalorder %s23, 1
      %p109 = por %p107, %p108
      %p111 = scmp.ne.s32.totalorder %s96, %s110
      %p112 = scmp.eq.s32.totalorder %s23, 0
      %p113 = por %p111, %p112
      %s115 = sadd.s32 %s114, 1
      %p118 = scmp.eq.s32.totalorder %s17, 1
      %p119 = scmp.ne.s32.totalorder %s114, %s116
      %p120 = scmp.eq.s32.totalorder %s17, 0
      %p121 = por %p119, %p120
      %p122 = scmp.ne.s32.totalorder %s114, %s116
      %p123 = scmp.eq.s32.totalorder %s22, 1
      %p124 = por %p122, %p123
      %p125 = scmp.ne.s32.totalorder %s116, %s117
      %p126 = scmp.eq.s32.totalorder %s22, 0
      %p127 = por %p125, %p126
      %p128 = scmp.ne.s32.totalorder %s116, %s117
      %p129 = scmp.eq.s32.totalorder %s23, 1
      %p130 = por %p128, %p129
      %p132 = scmp.ne.s32.totalorder %s117, %s131
      %p133 = scmp.eq.s32.totalorder %s23, 0
      %p134 = por %p132, %p133
      %s136 = sadd.s32 %s135, 1
      %p139 = scmp.eq.s32.totalorder %s17, 1
      %p140 = scmp.ne.s32.totalorder %s135, %s137
      %p141 = scmp.eq.s32.totalorder %s17, 0
      %p142 = por %p140, %p141
      %p143 = scmp.ne.s32.totalorder %s135, %s137
      %p144 = scmp.eq.s32.totalorder %s22, 1
      %p145 = por %p143, %p144
      %p146 = scmp.ne.s32.totalorder %s137, %s138
      %p147 = scmp.eq.s32.totalorder %s22, 0
      %p148 = por %p146, %p147
      %p149 = scmp.ne.s32.totalorder %s137, %s138
      %p150 = scmp.eq.s32.totalorder %s23, 1
      %p151 = por %p149, %p150
      %p153 = scmp.ne.s32.totalorder %s138, %s152
      %p154 = scmp.eq.s32.totalorder %s23, 0
      %p155 = por %p153, %p154
      %s157 = sadd.s32 %s156, 1
      %p160 = scmp.eq.s32.totalorder %s17, 1
      %p161 = scmp.ne.s32.totalorder %s156, %s158
      %p162 = scmp.eq.s32.totalorder %s17, 0
      %p163 = por %p161, %p162
      %p164 = scmp.ne.s32.totalorder %s156, %s158
      %p165 = scmp.eq.s32.totalorder %s22, 1
      %p166 = por %p164, %p165
      %p167 = scmp.ne.s32.totalorder %s158, %s159
      %p168 = scmp.eq.s32.totalorder %s22, 0
      %p169 = por %p167, %p168
      %p170 = scmp.ne.s32.totalorder %s158, %s159
      %p171 = scmp.eq.s32.totalorder %s23, 1
      %p172 = por %p170, %p171
      %p174 = scmp.ne.s32.totalorder %s159, %s173
      %p175 = scmp.eq.s32.totalorder %s23, 0
      %p176 = por %p174, %p175
      %s177 = ssub.s32 %s17, %s24
      %p178 = scmp.eq.s32.totalorder %s177, 0
      %s180 = sadd.s32 %s179, 1
      %s181 = scalar_select %p178, %s179, %s180
      %p184 = pneg %p178
      %p185 = scmp.eq.s32.totalorder %s17, 1
      %p186 = por %p184, %p185
      %p187 = scmp.ne.s32.totalorder %s179, %s182
      %p188 = scmp.eq.s32.totalorder %s17, 0
      %p189 = por %p187, %p188
      %p190 = scmp.ne.s32.totalorder %s179, %s182
      %p191 = scmp.eq.s32.totalorder %s22, 1
      %p192 = por %p190, %p191
      %p193 = scmp.ne.s32.totalorder %s182, %s183
      %p194 = scmp.eq.s32.totalorder %s22, 0
      %p195 = por %p193, %p194
      %p196 = scmp.ne.s32.totalorder %s182, %s183
      %p197 = scmp.eq.s32.totalorder %s23, 1
      %p198 = por %p196, %p197
      %p200 = scmp.ne.s32.totalorder %s183, %s199
      %p201 = scmp.eq.s32.totalorder %s23, 0
      %p202 = por %p200, %p201
      %p203 = scmp.le.s32.totalorder 1, %s17
      %p204 = scmp.lt.s32.totalorder %s17, 3
      %p205 = pnand %p203, %p204
      %p206 = pneg %p205
      // Predicated region
      $region9: #{tpu_custom_call.1} parent=5 // pred_check
        _
      $region10: #{tpu_custom_call.1} parent=5 // pred_check_branch
        %208 = sbr.rel (%p205) target = $region12
      $region11: #{tpu_custom_call.1} parent=5 // pred_region
        %s209 = ssub.s32 %s17, 1
        // Predicated region
        $region13: #{tpu_custom_call.1} parent=11 // pred_check
          %p210 = pneg %p64
        $region14: #{tpu_custom_call.1} parent=11 // pred_check_branch
          %212 = sbr.rel (%p210) target = $region16
        $region15: #{tpu_custom_call.1} parent=11 // pred_region
          _
        $region16: #{tpu_custom_call.1} parent=11 // pred_fallthru
          _
        // Predicated region
        $region17: #{tpu_custom_call.1} parent=11 // pred_check
          %p213 = pneg %p85
        $region18: #{tpu_custom_call.1} parent=11 // pred_check_branch
          %215 = sbr.rel (%p213) target = $region20
        $region19: #{tpu_custom_call.1} parent=11 // pred_region
          _
        $region20: #{tpu_custom_call.1} parent=11 // pred_fallthru
          _
        // Predicated region
        $region21: #{tpu_custom_call.1} parent=11 // pred_check
          %p216 = pneg %p106
        $region22: #{tpu_custom_call.1} parent=11 // pred_check_branch
          %218 = sbr.rel (%p216) target = $region24
        $region23: #{tpu_custom_call.1} parent=11 // pred_region
          _
        $region24: #{tpu_custom_call.1} parent=11 // pred_fallthru
          _
        // Predicated region
        $region25: #{tpu_custom_call.1} parent=11 // pred_check
          %p219 = pneg %p127
        $region26: #{tpu_custom_call.1} parent=11 // pred_check_branch
          %221 = sbr.rel (%p219) target = $region28
        $region27: #{tpu_custom_call.1} parent=11 // pred_region
          _
        $region28: #{tpu_custom_call.1} parent=11 // pred_fallthru
          _
        // Predicated region
        $region29: #{tpu_custom_call.1} parent=11 // pred_check
          %p222 = pneg %p148
        $region30: #{tpu_custom_call.1} parent=11 // pred_check_branch
          %224 = sbr.rel (%p222) target = $region32
        $region31: #{tpu_custom_call.1} parent=11 // pred_region
          _
        $region32: #{tpu_custom_call.1} parent=11 // pred_fallthru
          _
        // Predicated region
        $region33: #{tpu_custom_call.1} parent=11 // pred_check
          %p225 = pneg %p169
        $region34: #{tpu_custom_call.1} parent=11 // pred_check_branch
          %227 = sbr.rel (%p225) target = $region36
        $region35: #{tpu_custom_call.1} parent=11 // pred_region
          _
        $region36: #{tpu_custom_call.1} parent=11 // pred_fallthru
          _
      $region12: #{tpu_custom_call.1} parent=5 // pred_fallthru
        _
      %p228 = scmp.lt.s32.totalorder %s17, 2
      // Predicated region
      $region37: #{tpu_custom_call.1} parent=5 // pred_check
        %p229 = pneg %p228
      $region38: #{tpu_custom_call.1} parent=5 // pred_check_branch
        %231 = sbr.rel (%p229) target = $region40
      $region39: #{tpu_custom_call.1} parent=5 // pred_region
        // Predicated region
        $region41: #{tpu_custom_call.1} parent=39 // pred_check
          %p232 = pneg %p37
        $region42: #{tpu_custom_call.1} parent=39 // pred_check_branch
          %234 = sbr.rel (%p232) target = $region44
        $region43: #{tpu_custom_call.1} parent=39 // pred_region
          %p235 = scmp.lt.s32.totalorder %s17, 1
          %s236 = scalar_select %p235, %s17, 1
          %s237 = smul.addr %s236, 2
          %s238 = scalar_lea.vmem %s0, %s237
        $region44: #{tpu_custom_call.1} parent=39 // pred_fallthru
          _
      $region40: #{tpu_custom_call.1} parent=5 // pred_fallthru
        _
      %p239 = scmp.le.s32.totalorder 1, %s17
      %p240 = scmp.lt.s32.totalorder %s17, 3
      %p241 = pnand %p239, %p240
      %p242 = pneg %p241
      // Predicated region
      $region45: #{tpu_custom_call.1} parent=5 // pred_check
        _
      $region46: #{tpu_custom_call.1} parent=5 // pred_check_branch
        %244 = sbr.rel (%p241) target = $region48
      $region47: #{tpu_custom_call.1} parent=5 // pred_region
        %s245 = ssub.s32 %s17, 1
        %p246 = scmp.lt.s32.totalorder %s22, 1
        %s247 = scalar_select %p246, %s22, 1
        %s248 = smul.addr %s247, 2
        %s249 = scalar_lea.vmem %s0, %s248
        %p250 = pneg %p43
        %p251 = pneg %p40
        %p252 = pneg %p64
        %p253 = pneg %p61
        %p254 = pneg %p85
        %p255 = pneg %p82
        %p256 = pneg %p106
        %p257 = pneg %p103
        %p258 = pneg %p127
        %p259 = pneg %p124
        %p260 = pneg %p148
        %p261 = pneg %p145
        %p262 = pneg %p169
        %p263 = pneg %p166
        %p264 = pneg %p195
        %p265 = pneg %p192
        %s266 = sand.u32 %s182, 1
        %s267 = scalar_lea.sflag [#allocation4], %s266
        %s268 = sand.u32 %s182, 1
        %s269 = scalar_lea.vmem [#allocation3], %s268
        %p270 = scmp.lt.s32.totalorder %s22, 1
        %s271 = scalar_select %p270, %s22, 1
        %s272 = smul.addr %s271, 2
        %s273 = scalar_lea.vmem %s0, %s272
        %v275 = vld [vmem:[%s273] sm:$0x1]
        %v276 = vld [vmem:[%s273 + $0x1] sm:$0x1]
        %v277 = vld [vmem:[%s1] sm:$0xff]
        %v278 = vld [vmem:[%s1 + $0x8] sm:$0xff]
        %v279 = vld [vmem:[%s1 + $0x10] sm:$0xff]
        %v280 = vld [vmem:[%s1 + $0x18] sm:$0xff]
        %v281 = vld [vmem:[%s1 + $0x20] sm:$0xff]
        %v282 = vld [vmem:[%s1 + $0x28] sm:$0xff]
        %v283 = vld [vmem:[%s1 + $0x30] sm:$0xff]
        %v284 = vld [vmem:[%s1 + $0x38] sm:$0xff]
        %286 = vset.pattern.permute.xlu0 0
        %287 = vperm.xlu0 %286, %v277
        %v288 = vpop.permute.xlu0 %287
        %291 = vset.pattern.permute.xlu0 0
        %292 = vperm.xlu0 %291, %v278
        %v293 = vpop.permute.xlu0 %292
        %296 = vset.pattern.permute.xlu0 0
        %297 = vperm.xlu0 %296, %v279
        %v298 = vpop.permute.xlu0 %297
        %301 = vset.pattern.permute.xlu0 0
        %302 = vperm.xlu0 %301, %v280
        %v303 = vpop.permute.xlu0 %302
        %306 = vset.pattern.permute.xlu0 0
        %307 = vperm.xlu0 %306, %v281
        %v308 = vpop.permute.xlu0 %307
        %311 = vset.pattern.permute.xlu0 0
        %312 = vperm.xlu0 %311, %v282
        %v313 = vpop.permute.xlu0 %312
        %316 = vset.pattern.permute.xlu0 0
        %317 = vperm.xlu0 %316, %v283
        %v318 = vpop.permute.xlu0 %317
        %321 = vset.pattern.permute.xlu0 0
        %322 = vperm.xlu0 %321, %v284
        %v323 = vpop.permute.xlu0 %322
        %v325 = vperm.slane %v275, 0
        %v326 = vmul.f32 %v288, %v325
        %v327 = vmul.f32 %v293, %v325
        %v328 = vmul.f32 %v298, %v325
        %v329 = vmul.f32 %v303, %v325
        %v330 = vmul.f32 %v308, %v325
        %v331 = vmul.f32 %v313, %v325
        %v332 = vmul.f32 %v318, %v325
        %v333 = vmul.f32 %v323, %v325
        %334 = vset.pattern.permute.xlu0 1
        %335 = vperm.xlu0 %334, %v277
        %v336 = vpop.permute.xlu0 %335
        %338 = vset.pattern.permute.xlu0 1
        %339 = vperm.xlu0 %338, %v278
        %v340 = vpop.permute.xlu0 %339
        %342 = vset.pattern.permute.xlu0 1
        %343 = vperm.xlu0 %342, %v279
        %v344 = vpop.permute.xlu0 %343
        %346 = vset.pattern.permute.xlu0 1
        %347 = vperm.xlu0 %346, %v280
        %v348 = vpop.permute.xlu0 %347
        %350 = vset.pattern.permute.xlu0 1
        %351 = vperm.xlu0 %350, %v281
        %v352 = vpop.permute.xlu0 %351
        %354 = vset.pattern.permute.xlu0 1
        %355 = vperm.xlu0 %354, %v282
        %v356 = vpop.permute.xlu0 %355
        %358 = vset.pattern.permute.xlu0 1
        %359 = vperm.xlu0 %358, %v283
        %v360 = vpop.permute.xlu0 %359
        %362 = vset.pattern.permute.xlu0 1
        %363 = vperm.xlu0 %362, %v284
        %v364 = vpop.permute.xlu0 %363
        %v366 = vperm.slane %v276, 0
        %v367 = vmul.f32 %v336, %v366
        %v368 = vmul.f32 %v340, %v366
        %v369 = vmul.f32 %v344, %v366
        %v370 = vmul.f32 %v348, %v366
        %v371 = vmul.f32 %v352, %v366
        %v372 = vmul.f32 %v356, %v366
        %v373 = vmul.f32 %v360, %v366
        %v374 = vmul.f32 %v364, %v366
        %v375 = vadd.f32 %v326, %v367
        %v376 = vadd.f32 %v327, %v368
        %v377 = vadd.f32 %v328, %v369
        %v378 = vadd.f32 %v329, %v370
        %v379 = vadd.f32 %v330, %v371
        %v380 = vadd.f32 %v331, %v372
        %v381 = vadd.f32 %v332, %v373
        %v382 = vadd.f32 %v333, %v374
        %v383 = vld [vmem:[%s2] sm:$0xff]
        %v384 = vld [vmem:[%s2 + $0x8] sm:$0xff]
        %v385 = vld [vmem:[%s2 + $0x10] sm:$0xff]
        %v386 = vld [vmem:[%s2 + $0x18] sm:$0xff]
        %v387 = vld [vmem:[%s2 + $0x20] sm:$0xff]
        %v388 = vld [vmem:[%s2 + $0x28] sm:$0xff]
        %v389 = vld [vmem:[%s2 + $0x30] sm:$0xff]
        %v390 = vld [vmem:[%s2 + $0x38] sm:$0xff]
        %392 = vset.pattern.permute.xlu0 0
        %393 = vperm.xlu0 %392, %v383
        %v394 = vpop.permute.xlu0 %393
        %397 = vset.pattern.permute.xlu0 0
        %398 = vperm.xlu0 %397, %v384
        %v399 = vpop.permute.xlu0 %398
        %402 = vset.pattern.permute.xlu0 0
        %403 = vperm.xlu0 %402, %v385
        %v404 = vpop.permute.xlu0 %403
        %407 = vset.pattern.permute.xlu0 0
        %408 = vperm.xlu0 %407, %v386
        %v409 = vpop.permute.xlu0 %408
        %412 = vset.pattern.permute.xlu0 0
        %413 = vperm.xlu0 %412, %v387
        %v414 = vpop.permute.xlu0 %413
        %417 = vset.pattern.permute.xlu0 0
        %418 = vperm.xlu0 %417, %v388
        %v419 = vpop.permute.xlu0 %418
        %422 = vset.pattern.permute.xlu0 0
        %423 = vperm.xlu0 %422, %v389
        %v424 = vpop.permute.xlu0 %423
        %427 = vset.pattern.permute.xlu0 0
        %428 = vperm.xlu0 %427, %v390
        %v429 = vpop.permute.xlu0 %428
        %v431 = vadd.f32 %v375, %v394
        %v432 = vadd.f32 %v376, %v399
        %v433 = vadd.f32 %v377, %v404
        %v434 = vadd.f32 %v378, %v409
        %v435 = vadd.f32 %v379, %v414
        %v436 = vadd.f32 %v380, %v419
        %v437 = vadd.f32 %v381, %v424
        %v438 = vadd.f32 %v382, %v429
        %v439 = vmax.f32 %v431, 0.0
        %v440 = vmax.f32 %v432, 0.0
        %v441 = vmax.f32 %v433, 0.0
        %v442 = vmax.f32 %v434, 0.0
        %v443 = vmax.f32 %v435, 0.0
        %v444 = vmax.f32 %v436, 0.0
        %v445 = vmax.f32 %v437, 0.0
        %v446 = vmax.f32 %v438, 0.0
        %v447 = vld [vmem:[%s3] sm:$0xf]
        %v448 = vld [vmem:[%s3 + $0x4] sm:$0xf]
        %v449 = vld [vmem:[%s3 + $0x8] sm:$0xf]
        %v450 = vld [vmem:[%s3 + $0xc] sm:$0xf]
        %v451 = vld [vmem:[%s3 + $0x10] sm:$0xf]
        %v452 = vld [vmem:[%s3 + $0x14] sm:$0xf]
        %v453 = vld [vmem:[%s3 + $0x18] sm:$0xf]
        %v454 = vld [vmem:[%s3 + $0x1c] sm:$0xf]
        %v455 = vpack.c.bf16 %v440, %v439
        %v456 = vpack.c.bf16 %v442, %v441
        %v457 = vpack.c.bf16 %v444, %v443
        %v458 = vpack.c.bf16 %v446, %v445
        %v459 = vld [vmem:[%s4] sm:$0xff]
        %v460 = vld [vmem:[%s4 + $0x8] sm:$0xff]
        %v461 = vld [vmem:[%s4 + $0x10] sm:$0xff]
        %v462 = vld [vmem:[%s4 + $0x18] sm:$0xff]
        %v463 = vld [vmem:[%s4 + $0x20] sm:$0xff]
        %v464 = vld [vmem:[%s4 + $0x28] sm:$0xff]
        %v465 = vld [vmem:[%s4 + $0x30] sm:$0xff]
        %v466 = vld [vmem:[%s4 + $0x38] sm:$0xff]
        %468 = vset.pattern.permute.xlu0 0
        %469 = vperm.xlu0 %468, %v459
        %v470 = vpop.permute.xlu0 %469
        %473 = vset.pattern.permute.xlu0 0
        %474 = vperm.xlu0 %473, %v460
        %v475 = vpop.permute.xlu0 %474
        %478 = vset.pattern.permute.xlu0 0
        %479 = vperm.xlu0 %478, %v461
        %v480 = vpop.permute.xlu0 %479
        %483 = vset.pattern.permute.xlu0 0
        %484 = vperm.xlu0 %483, %v462
        %v485 = vpop.permute.xlu0 %484
        %488 = vset.pattern.permute.xlu0 0
        %489 = vperm.xlu0 %488, %v463
        %v490 = vpop.permute.xlu0 %489
        %493 = vset.pattern.permute.xlu0 0
        %494 = vperm.xlu0 %493, %v464
        %v495 = vpop.permute.xlu0 %494
        %498 = vset.pattern.permute.xlu0 0
        %499 = vperm.xlu0 %498, %v465
        %v500 = vpop.permute.xlu0 %499
        %503 = vset.pattern.permute.xlu0 0
        %504 = vperm.xlu0 %503, %v466
        %v505 = vpop.permute.xlu0 %504
        %v515 = vunpack.c.l.b16 %v447
        %v516 = vunpack.c.l.b16 %v448
        %v517 = vunpack.c.l.b16 %v449
        %v518 = vunpack.c.l.b16 %v450
        %v519 = vunpack.c.l.b16 %v451
        %v520 = vunpack.c.l.b16 %v452
        %v521 = vunpack.c.l.b16 %v453
        %v522 = vunpack.c.l.b16 %v454
        %v523 = vpack.c.b16 %v516, %v515
        %v524 = vpack.c.b16 %v518, %v517
        %v525 = vpack.c.b16 %v520, %v519
        %v526 = vpack.c.b16 %v522, %v521
        %vm527 = vcmask 523264
        %v529 = vsel %vm527, %v523, 0
        %v532 = vsel %vm527, %v524, 0
        %v535 = vsel %vm527, %v525, 0
        %v538 = vsel %vm527, %v526, 0
        %540 = vmatpush.bf16.msra.mxu0 0
        %541 = vmatpush.bf16.msra.mxu0 0
        %542 = vmatpush.bf16.msra.mxu0 0
        %543 = vmatpush.bf16.msra.mxu0 0
        %544 = vmatpush.bf16.msra.mxu0 %v458
        %545 = vmatpush.bf16.msra.mxu0 %v457
        %546 = vmatpush.bf16.msra.mxu0 %v456
        %547 = vmatpush.bf16.msra.mxu0 %v455
        %548 = vmatmul.bf16.gmra.mxu0 %v529
        %v549 = vpop.f32.mrf.mxu0
        %v550 = vadd.f32 %v470, %v549
        %v551 = vpop.f32.mrf.mxu0
        %v552 = vadd.f32 %v475, %v551
        %553 = vmatmul.bf16.gmra.mxu0 %v532
        %v554 = vpop.f32.mrf.mxu0
        %v555 = vadd.f32 %v480, %v554
        %v556 = vpop.f32.mrf.mxu0
        %v557 = vadd.f32 %v485, %v556
        %558 = vmatmul.bf16.gmra.mxu0 %v535
        %v559 = vpop.f32.mrf.mxu0
        %v560 = vadd.f32 %v490, %v559
        %v561 = vpop.f32.mrf.mxu0
        %v562 = vadd.f32 %v495, %v561
        %563 = vmatmul.bf16.gmra.mxu0 %v538
        %v564 = vpop.f32.mrf.mxu0
        %v565 = vadd.f32 %v500, %v564
        %v566 = vpop.f32.mrf.mxu0
        %v567 = vadd.f32 %v505, %v566
        %568 = vdwg.mxu0
        %v569 = vmax.f32 %v550, 0.0
        %v570 = vmax.f32 %v552, 0.0
        %v571 = vmax.f32 %v555, 0.0
        %v572 = vmax.f32 %v557, 0.0
        %v573 = vmax.f32 %v560, 0.0
        %v574 = vmax.f32 %v562, 0.0
        %v575 = vmax.f32 %v565, 0.0
        %v576 = vmax.f32 %v567, 0.0
        %v577 = vld [vmem:[%s5] sm:$0x1]
        %v578 = vpack.c.bf16 %v570, %v569
        %v579 = vpack.c.bf16 %v572, %v571
        %v580 = vpack.c.bf16 %v574, %v573
        %v581 = vpack.c.bf16 %v576, %v575
        %s582 = sld [smem:[#allocation2]]
        %v583 = vstv %s582
        %v585 = vsel %vm527, %v577, 0
        %587 = vmatpush.bf16.msra.mxu0 0
        %588 = vmatpush.bf16.msra.mxu0 0
        %589 = vmatpush.bf16.msra.mxu0 0
        %590 = vmatpush.bf16.msra.mxu0 0
        %591 = vmatpush.bf16.msra.mxu0 %v581
        %592 = vmatpush.bf16.msra.mxu0 %v580
        %593 = vmatpush.bf16.msra.mxu0 %v579
        %594 = vmatpush.bf16.msra.mxu0 %v578
        %595 = vmatmul.bf16.gmra.mxu0 %v585
        %v596 = vpop.f32.mrf.mxu0
        %v597 = vadd.f32 %v583, %v596
        %v598 = vpop.f32.mrf.mxu0
        %599 = vdwg.mxu0
        %600 = vst [vmem:[%s269] sm:$0x1] %v597
        %s601 = sand.u32 %s182, 1
        %s602 = scalar_lea.sflag [#allocation4], %s601
        %s603 = sand.u32 %s182, 1
        %s604 = scalar_lea.vmem [#allocation3], %s603
        // Predicated region
        $region49: #{tpu_custom_call.1} parent=47 // pred_check
          %p605 = pneg %p192
        $region50: #{tpu_custom_call.1} parent=47 // pred_check_branch
          %607 = sbr.rel (%p605) target = $region52
        $region51: #{tpu_custom_call.1} parent=47 // pred_region
          %609 = vsyncadd %s602, 0
          %s610 = scalar_lea.hbm %s7, %s22
          %s612 = sshll.u32 %s604, 4
          %s613 = int_to_ptr.vmem [resolvable:$true] %s612
          %s614 = sshll.u32 %s610, 4
          %s615 = int_to_ptr.hbm [resolvable:$true] %s614
          %617 = dma.vmem_to_hbm [thread:$0]  %s613, 16, %s615, %s602
        $region52: #{tpu_custom_call.1} parent=47 // pred_fallthru
          _
      $region48: #{tpu_custom_call.1} parent=5 // pred_fallthru
        _
      %p618 = scmp.le.s32.totalorder 2, %s17
      // Predicated region
      $region53: #{tpu_custom_call.1} parent=5 // pred_check
        %p619 = pneg %p618
      $region54: #{tpu_custom_call.1} parent=5 // pred_check_branch
        %621 = sbr.rel (%p619) target = $region56
      $region55: #{tpu_custom_call.1} parent=5 // pred_region
        %s622 = ssub.s32 %s17, 2
        // Predicated region
        $region57: #{tpu_custom_call.1} parent=55 // pred_check
          %p623 = pneg %p198
        $region58: #{tpu_custom_call.1} parent=55 // pred_check_branch
          %625 = sbr.rel (%p623) target = $region60
        $region59: #{tpu_custom_call.1} parent=55 // pred_region
          %s626 = sand.u32 %s183, 1
          %s627 = scalar_lea.sflag [#allocation4], %s626
          %s628 = sand.u32 %s183, 1
          %s629 = scalar_lea.vmem [#allocation3], %s628
          %631 = dma.done %s627, 16
        $region60: #{tpu_custom_call.1} parent=55 // pred_fallthru
          _
      $region56: #{tpu_custom_call.1} parent=5 // pred_fallthru
        _
    $region6: #{tpu_custom_call.1} parent=1 // loop_footer
      %s21 = sadd.s32 1, %s17
    $region7: #{tpu_custom_call.1} parent=1 // loop_footer_branch
      %16 = sbr.rel target = $region3
    $region8: #{tpu_custom_call.1} parent=1 // loop_exit
      _
    %632 = vsyncpa [#allocation4], 1
    %s633 = scalar_lea.sflag [#allocation4], 1
    %634 = vsyncpa %s633, 1

</llo_original>
